<compile_context>
chip_gen: v7x
topology: tpu7x:2x2x1
jax: 0.10.0
libtpu: 0.0.40
codegen_flags: <defaults>
</compile_context>

<pallas_src>
import functools

import jax
import jax.numpy as jnp
from jax.experimental import pallas as pl
from jax.experimental.pallas import tpu as pltpu

_VMEM_LIMIT = 32 * 1024 * 1024


def _round_up(v, m):
    return (v + m - 1) // m * m


# ----------------------------- Pallas kernels ------------------------------

def _matmul_kernel(x_ref, w_ref, b_ref, o_ref, acc_ref):
    @pl.when(pl.program_id(2) == 0)
    def _():
        acc_ref[...] = jnp.zeros_like(acc_ref)

    acc_ref[...] += jnp.dot(x_ref[...], w_ref[...],
                            preferred_element_type=jnp.float32)

    @pl.when(pl.program_id(2) == pl.num_programs(2) - 1)
    def _():
        o_ref[...] = (acc_ref[...] + b_ref[...]).astype(o_ref.dtype)


def linear(x2d, w, b):
    """y = x @ w + b  (x: (M,K) f32, w: (K,N) bf16/f32, b: (N,)). Output f32."""
    M, K = x2d.shape
    N = w.shape[1]
    tm = 128 if M >= 128 else _round_up(M, 8)
    tn = 128
    tk = 256 if K >= 256 else _round_up(K, 128)
    Mp, Kp, Np = _round_up(M, tm), _round_up(K, tk), _round_up(N, tn)

    xb = x2d.astype(jnp.bfloat16)
    wb = w.astype(jnp.bfloat16)
    bb = b.astype(jnp.float32).reshape(1, N)
    if (Mp, Kp) != (M, K):
        xb = jnp.pad(xb, ((0, Mp - M), (0, Kp - K)))
    if (Kp, Np) != (K, N):
        wb = jnp.pad(wb, ((0, Kp - K), (0, Np - N)))
    if Np != N:
        bb = jnp.pad(bb, ((0, 0), (0, Np - N)))

    out = pl.pallas_call(
        _matmul_kernel,
        out_shape=jax.ShapeDtypeStruct((Mp, Np), jnp.float32),
        grid=(Mp // tm, Np // tn, Kp // tk),
        in_specs=[pl.BlockSpec((tm, tk), lambda i, j, k: (i, k)),
                  pl.BlockSpec((tk, tn), lambda i, j, k: (k, j)),
                  pl.BlockSpec((1, tn), lambda i, j, k: (0, j))],
        out_specs=pl.BlockSpec((tm, tn), lambda i, j, k: (i, j)),
        scratch_shapes=[pltpu.VMEM((tm, tn), jnp.float32)],
        compiler_params=pltpu.CompilerParams(
            dimension_semantics=("parallel", "parallel", "arbitrary"),
            vmem_limit_bytes=_VMEM_LIMIT),
    )(xb, wb, bb)
    return out[:M, :N]


def _layernorm_kernel(x_ref, g_ref, b_ref, o_ref, *, eps):
    x = x_ref[...]
    mu = jnp.mean(x, axis=-1, keepdims=True)
    xc = x - mu
    var = jnp.mean(xc * xc, axis=-1, keepdims=True)
    o_ref[...] = xc * jax.lax.rsqrt(var + eps) * g_ref[...] + b_ref[...]


def layernorm(x2d, g, b, eps):
    M, C = x2d.shape
    tr = 512 if M >= 512 else _round_up(M, 8)
    Mp = _round_up(M, tr)
    xp = x2d.astype(jnp.float32)
    if Mp != M:
        xp = jnp.pad(xp, ((0, Mp - M), (0, 0)))
    out = pl.pallas_call(
        functools.partial(_layernorm_kernel, eps=eps),
        out_shape=jax.ShapeDtypeStruct((Mp, C), jnp.float32),
        grid=(Mp // tr,),
        in_specs=[pl.BlockSpec((tr, C), lambda i: (i, 0)),
                  pl.BlockSpec((1, C), lambda i: (0, 0)),
                  pl.BlockSpec((1, C), lambda i: (0, 0))],
        out_specs=pl.BlockSpec((tr, C), lambda i: (i, 0)),
        compiler_params=pltpu.CompilerParams(
            dimension_semantics=("parallel",),
            vmem_limit_bytes=_VMEM_LIMIT),
    )(xp, g.reshape(1, C).astype(jnp.float32), b.reshape(1, C).astype(jnp.float32))
    return out[:M]


def _attn_policy_kernel(qkv_ref, pol_ref, eye_ref, o_ref, *, num_heads, scale):
    # qkv: (1, N, 3C), pol: (1, 1, N), eye: (N, N), out: (1, N, C).
    # Implements Attention.softmax_with_policy with eps == 0 (eval path).
    qkv = qkv_ref[0]                                # (N, 3C) f32
    pol = pol_ref[0]                                # (1, N)  f32
    eye = eye_ref[...]                              # (N, N)  f32
    N, C3 = qkv.shape
    C = C3 // 3
    hd = C // num_heads
    # attn_policy[i, j] = pol[j] + (1 - pol[j]) * eye[i, j]; eye precomputed once.
    ap = pol + (1.0 - pol) * eye                    # (N, N)
    for h in range(num_heads):
        q = qkv[:, h * hd:(h + 1) * hd].astype(jnp.bfloat16)
        k = qkv[:, C + h * hd:C + (h + 1) * hd].astype(jnp.bfloat16)
        v = qkv[:, 2 * C + h * hd:2 * C + (h + 1) * hd].astype(jnp.bfloat16)
        s = jax.lax.dot_general(q, k, (((1,), (1,)), ((), ())),
                                preferred_element_type=jnp.float32) * scale
        m = jnp.max(s, axis=-1, keepdims=True)
        e = jnp.exp(s - m) * ap                     # f32 reductions
        denom = jnp.sum(e, axis=-1, keepdims=True)
        p = e * pl.reciprocal(denom, approx=True)   # eval: eps == 0
        o = jnp.dot(p.astype(jnp.bfloat16), v, preferred_element_type=jnp.float32)
        o_ref[0, :, h * hd:(h + 1) * hd] = o        # lane-dense (N, C) output block


def attention_policy(qkv, pol, num_heads, scale):
    B, N, C3 = qkv.shape
    C = C3 // 3
    eye = jnp.eye(N, dtype=jnp.float32)
    return pl.pallas_call(
        functools.partial(_attn_policy_kernel, num_heads=num_heads, scale=scale),
        out_shape=jax.ShapeDtypeStruct((B, N, C), jnp.float32),
        grid=(B,),
        in_specs=[pl.BlockSpec((1, N, C3), lambda b: (b, 0, 0)),
                  pl.BlockSpec((1, 1, N), lambda b: (b, 0, 0)),
                  pl.BlockSpec((N, N), lambda b: (0, 0))],
        out_specs=pl.BlockSpec((1, N, C), lambda b: (b, 0, 0)),
        compiler_params=pltpu.CompilerParams(
            dimension_semantics=("parallel",),
            vmem_limit_bytes=_VMEM_LIMIT),
    )(qkv, pol, eye)


def _mlerp_kernel(x_ref, s_ref, o_ref):
    # x: (1, N, C) spatial tokens, s: (1, N, 1) placeholder scores, out: (1, 1, C).
    x = x_ref[0]                                               # (N, C)
    s = s_ref[0]                                               # (N, 1)
    tok_norm = jnp.sqrt(jnp.sum(x * x, axis=1, keepdims=True))  # (N, 1)
    mask = (s > 1e-8).astype(x.dtype)
    max_norm = jnp.max(tok_norm * mask, axis=0, keepdims=True) + 1e-8   # (1, 1)
    wsum = jnp.sum(x * s, axis=0, keepdims=True)               # (1, C)
    ssum = jnp.sum(s, axis=0, keepdims=True) + 1e-8            # (1, 1)
    avg = wsum / ssum
    nrm = jnp.sqrt(jnp.sum(avg * avg, axis=1, keepdims=True)) + 1e-8
    o_ref[0] = avg / nrm * max_norm


def mlerp_token(spatial_x, placeholder_score):
    B, N, C = spatial_x.shape
    return pl.pallas_call(
        _mlerp_kernel,
        out_shape=jax.ShapeDtypeStruct((B, 1, C), jnp.float32),
        grid=(B,),
        in_specs=[pl.BlockSpec((1, N, C), lambda b: (b, 0, 0)),
                  pl.BlockSpec((1, N, 1), lambda b: (b, 0, 0))],
        out_specs=pl.BlockSpec((1, 1, C), lambda b: (b, 0, 0)),
        compiler_params=pltpu.CompilerParams(
            dimension_semantics=("parallel",),
            vmem_limit_bytes=_VMEM_LIMIT),
    )(spatial_x.astype(jnp.float32), placeholder_score.astype(jnp.float32))


# ------------------------------- JAX glue ----------------------------------

def gelu(x):
    # torch.nn.GELU() default is exact (erf) GELU.
    # TODO(synk): fuse erf-GELU into the matmul epilogue once lax.erf lowering in Mosaic is confirmed.
    return jax.nn.gelu(x, approximate=False)


def linear_nd(x, w, b):
    shp = x.shape
    y = linear(x.reshape(-1, shp[-1]), w, b)
    return y.reshape(shp[:-1] + (w.shape[1],))


def layernorm_nd(x, g, b, eps):
    shp = x.shape
    y = layernorm(x.reshape(-1, shp[-1]), g, b, eps)
    return y.reshape(shp)


def attention(x, p, policy, num_heads, scale):
    B, N, C = x.shape
    qkv = linear(x.reshape(B * N, C), p['wqkv'], p['bqkv']).reshape(B, N, 3 * C)
    pol = policy[:, :, 0].reshape(B, 1, N).astype(jnp.float32)
    o = attention_policy(qkv, pol, num_heads, scale)           # (B, N, C), lane-dense
    return linear(o.reshape(B * N, C), p['wproj'], p['bproj']).reshape(B, N, C)


def mlp(x, p):
    h = gelu(linear_nd(x, p['w1'], p['b1']))
    return linear_nd(h, p['w2'], p['b2'])


def block(x, p, policy, num_heads, scale):
    x = x + attention(layernorm_nd(x, p['norm1_g'], p['norm1_b'], 1e-6),
                      p['attn'], policy, num_heads, scale)
    x = x + mlp(layernorm_nd(x, p['norm2_g'], p['norm2_b'], 1e-6), p['mlp'])
    return x


def predictor(x, prev_decision, p, num_heads, embed_dim):
    """MultiheadPredictorLG forward (in_conv / out_conv weights shared across heads)."""
    # TODO(synk): fuse the predictor's small LN/linears into one Pallas kernel to avoid
    #             per-call padding + launch overhead on these tiny GEMMs.
    B, N, C = x.shape
    hd = embed_dim // num_heads
    # AdaptiveAvgPool2d((N, num_heads)) == mean over contiguous channel chunks.
    x_head = x.reshape(B, N, num_heads, hd).mean(axis=-1)      # (B, N, H)
    h = gelu(linear_nd(x_head, p['se_w1'], p['se_b1']))
    head_weights = jax.nn.sigmoid(linear_nd(h, p['se_w2'], p['se_b2']))   # (B, N, H)
    head_weights_sum = head_weights.sum(axis=2, keepdims=True)            # (B, N, 1)

    xh = x.reshape(B, N, num_heads, hd)
    x1 = layernorm_nd(xh, p['in_ln_g'], p['in_ln_b'], 1e-5)
    x1 = gelu(linear_nd(x1, p['in_w'], p['in_b']))                        # (B, N, H, hd)
    half = hd // 2
    local = x1[..., :half]
    pol4 = prev_decision[:, :, None, :]                                   # (B, N, 1, 1)
    gsum = jnp.sum(x1[..., half:] * pol4, axis=1, keepdims=True)          # (B, 1, H, half)
    psum = jnp.sum(prev_decision, axis=1, keepdims=True)[:, :, None, :]   # (B, 1, 1, 1)
    gx = gsum / psum
    x1 = jnp.concatenate([local, jnp.broadcast_to(gx, local.shape)], axis=-1)
    y = gelu(linear_nd(x1, p['out_w1'], p['out_b1']))
    y = gelu(linear_nd(y, p['out_w2'], p['out_b2']))
    y = linear_nd(y, p['out_w3'], p['out_b3'])                            # (B, N, H, 2)

    sm = jax.nn.softmax(y, axis=-1) * head_weights[..., None]
    lsm = jax.nn.log_softmax(y, axis=-1) * head_weights[..., None]
    multihead_softmax_score = sm.sum(axis=2) / head_weights_sum           # (B, N, 2)
    multihead_score = lsm.sum(axis=2) / head_weights_sum                  # (B, N, 2)
    return multihead_score, multihead_softmax_score


def gumbel_softmax_hard(logits, key):
    # F.gumbel_softmax(..., hard=True) forward value == one-hot argmax of logits + gumbel.
    # Note: the reference calls this in eval mode too (it is not gated on self.training).
    g = jax.random.gumbel(key, logits.shape, dtype=logits.dtype)
    idx = jnp.argmax(logits + g, axis=-1)
    return jax.nn.one_hot(idx, logits.shape[-1], dtype=logits.dtype)


def vit_forward(x_img, params, cfg, key):
    """Eval-mode forward of VisionTransformerDiffPruning. Returns (logits, sparse)."""
    B, C_in, H, W = x_img.shape
    P = cfg['patch_size']
    E = cfg['embed_dim']
    Hp, Wp = H // P, W // P

    # PatchEmbed: Conv2d(kernel=stride=P) as im2col + Pallas tiled matmul.
    xp = x_img.reshape(B, C_in, Hp, P, Wp, P)
    xp = xp.transpose(0, 2, 4, 1, 3, 5).reshape(B, Hp * Wp, C_in * P * P)
    x = linear_nd(xp.astype(jnp.float32), params['patch_w'], params['patch_b'])

    cls = jnp.broadcast_to(params['cls_token'], (B, 1, E))
    x = jnp.concatenate([cls, x], axis=1)
    x = x + params['pos_embed']

    init_n = 14 * 14
    policy = jnp.ones((B, init_n + 1, 1), jnp.float32)
    prev_decision = jnp.ones((B, init_n, 1), jnp.float32)
    p_count = 0
    sparse = []
    scale = (E // cfg['num_heads']) ** (-0.5)

    for i in range(cfg['depth']):
        bp = params['blocks'][i]
        if i in cfg['pruning_loc']:
            spatial_x = x[:, 1:]
            if i != cfg['pruning_loc'][0]:
                rep_decision = jnp.ones((B, p_count, 1), jnp.float32)
                prev_decision = jnp.concatenate([prev_decision, rep_decision], axis=1)
            pred_score, softmax_score = predictor(
                spatial_x, prev_decision, params['predictors'][p_count],
                cfg['num_heads'], E)
            onehot = gumbel_softmax_hard(pred_score, jax.random.fold_in(key, i))
            if i == cfg['pruning_loc'][0]:
                hard_keep_decision = onehot[:, :, 0:1] * prev_decision
                hard_drop_decision = 1.0 - hard_keep_decision - (1.0 - prev_decision)
            else:
                hard_keep_decision_all = onehot[:, :, 0:1] * prev_decision
                hard_keep_decision = jnp.concatenate(
                    [hard_keep_decision_all[:, :-p_count], rep_decision], axis=1)
                hard_drop_decision = 1.0 - hard_keep_decision - (1.0 - prev_decision)
            placeholder_score = softmax_score[:, :, 0:1] * hard_drop_decision
            rep_tok = mlerp_token(spatial_x, placeholder_score)            # (B, 1, E)
            x = jnp.concatenate([x, rep_tok], axis=1)
            if i != cfg['pruning_loc'][0]:
                hard_keep_decision = hard_keep_decision[:, :-p_count]
            cls_policy = jnp.ones((B, 1, 1), jnp.float32)
            rep_policy = jnp.ones((B, p_count + 1, 1), jnp.float32)
            policy = jnp.concatenate([cls_policy, hard_keep_decision, rep_policy], axis=1)
            x = block(x, bp, policy, cfg['num_heads'], scale)
            prev_decision = hard_keep_decision
            zeros = jnp.sum(policy == 0).astype(jnp.float32)
            nonzeros = jnp.sum(policy != 0).astype(jnp.float32)
            sparse.append(jnp.stack([zeros, nonzeros]))
            # TODO(synk): eval branch also dumps per-step scores to a JSON file; skipped (no file I/O).
            p_count += 1
        else:
            x = block(x, bp, policy, cfg['num_heads'], scale)

    x = layernorm_nd(x, params['norm_g'], params['norm_b'], 1e-6)
    cls_out = x[:, 0]                          # pre_logits is Identity (no representation_size)
    logits = linear(cls_out, params['head_w'], params['head_b'])
    sparse = jnp.stack(sparse) if sparse else jnp.zeros((0, 2), jnp.float32)
    return logits, sparse


# ------------------------- deterministic parameters -------------------------

def init_params(key, cfg):
    E = cfg['embed_dim']
    Hh = cfg['num_heads']
    hd = E // Hh
    P = cfg['patch_size']
    Cin = cfg['in_chans']
    num_patches = (cfg['img_size'] // P) ** 2
    mlp_hidden = int(E * cfg['mlp_ratio'])

    keys = iter(jax.random.split(key, 512))

    def w(shape, std=0.02):
        # Matmul weights are stored in bf16 once (MXU inputs); biases/LN stay f32.
        return (std * jax.random.normal(next(keys), shape)).astype(jnp.bfloat16)

    def zeros(shape):
        return jnp.zeros(shape, jnp.float32)

    def ones(shape):
        return jnp.ones(shape, jnp.float32)

    def wf32(shape, std=0.02):
        return (std * jax.random.normal(next(keys), shape)).astype(jnp.float32)

    params = dict(
        patch_w=w((Cin * P * P, E)), patch_b=zeros((E,)),
        cls_token=wf32((1, 1, E)), pos_embed=wf32((1, num_patches + 1, E)),
        norm_g=ones((E,)), norm_b=zeros((E,)),
        head_w=w((E, cfg['num_classes'])), head_b=zeros((cfg['num_classes'],)),
    )
    blocks = []
    for _ in range(cfg['depth']):
        blocks.append(dict(
            norm1_g=ones((E,)), norm1_b=zeros((E,)),
            norm2_g=ones((E,)), norm2_b=zeros((E,)),
            attn=dict(wqkv=w((E, 3 * E)), bqkv=zeros((3 * E,)),
                      wproj=w((E, E)), bproj=zeros((E,))),
            mlp=dict(w1=w((E, mlp_hidden)), b1=zeros((mlp_hidden,)),
                     w2=w((mlp_hidden, E)), b2=zeros((E,))),
        ))
    params['blocks'] = blocks
    preds = []
    for _ in range(len(cfg['pruning_loc'])):
        # in_conv / out_conv are the SAME module repeated per head in the reference,
        # so a single shared set of weights per predictor.
        preds.append(dict(
            se_w1=w((Hh, Hh // 2)), se_b1=zeros((Hh // 2,)),
            se_w2=w((Hh // 2, Hh)), se_b2=zeros((Hh,)),
            in_ln_g=ones((hd,)), in_ln_b=zeros((hd,)),
            in_w=w((hd, hd)), in_b=zeros((hd,)),
            out_w1=w((hd, hd // 2)), out_b1=zeros((hd // 2,)),
            out_w2=w((hd // 2, hd // 4)), out_b2=zeros((hd // 4,)),
            out_w3=w((hd // 4, 2)), out_b3=zeros((2,)),
        ))
    params['predictors'] = preds
    return params


# ----------------------------------- main -----------------------------------

if __name__ == "__main__":
    # Small config; num_patches must equal the hard-coded init_n = 14*14 = 196,
    # so use img_size=28, patch_size=2 (14x14 grid) with a small embed_dim.
    cfg = dict(img_size=28, patch_size=2, in_chans=3, embed_dim=32, depth=4,
               num_heads=4, mlp_ratio=4.0, num_classes=10, pruning_loc=[1, 2, 3])

    key = jax.random.PRNGKey(0)
    k_param, k_in, k_gumbel = jax.random.split(key, 3)
    params = init_params(k_param, cfg)
    x = jax.random.normal(
        k_in, (2, cfg['in_chans'], cfg['img_size'], cfg['img_size']), jnp.float32)

    logits, sparse = vit_forward(x, params, cfg, k_gumbel)
    jax.block_until_ready((logits, sparse))
    assert logits.shape == (2, cfg['num_classes'])
    assert sparse.shape == (len(cfg['pruning_loc']), 2)
    print("KERNEL_OK")
</pallas_src>

<mosaic_0001>
module attributes {stable_mosaic.version = 11 : i64} {
  func.func @_matmul_kernel(%arg0: i32, %arg1: i32, %arg2: i32, %arg3: memref<128x128xbf16, #tpu.memory_space<vmem>>, %arg4: memref<128x128xbf16, #tpu.memory_space<vmem>>, %arg5: memref<1x128xf32, #tpu.memory_space<vmem>>, %arg6: memref<128x128xf32, #tpu.memory_space<vmem>>, %arg7: memref<128x128xf32, #tpu.memory_space<vmem>>) attributes {dimension_semantics = [#tpu.dimension_semantics<parallel>, #tpu.dimension_semantics<parallel>, #tpu.dimension_semantics<arbitrary>], iteration_bounds = array<i64: 4, 1, 1>, scalar_prefetch = 0 : i64, scratch_operands = 1 : i64, tpu.core_type = #tpu.core_type<tc>, window_params = [{transform_indices = @transform_0, window_bounds = array<i64: 128, 128>}, {transform_indices = @transform_1, window_bounds = array<i64: 128, 128>}, {transform_indices = @transform_2, window_bounds = array<i64: 1, 128>}, {transform_indices = @transform_3, window_bounds = array<i64: 128, 128>}]} {
    %c0_i32 = arith.constant 0 : i32
    %0 = arith.cmpi eq, %arg2, %c0_i32 : i32
    %1 = arith.extui %0 : i1 to i32
    %c0_i32_0 = arith.constant 0 : i32
    %2 = arith.cmpi ne, %1, %c0_i32_0 : i32
    scf.if %2 {
      %cst_10 = arith.constant 0.000000e+00 : f32
      %12 = vector.broadcast %cst_10 : f32 to vector<128x128xf32>
      %c0_11 = arith.constant 0 : index
      %c0_12 = arith.constant 0 : index
      %13 = vector.load %arg7[%c0_11, %c0_12] : memref<128x128xf32, #tpu.memory_space<vmem>>, vector<128x128xf32>
      tpu.vector_store %arg7[%c0_11, %c0_12], %12 {strides = array<i32>} : memref<128x128xf32, #tpu.memory_space<vmem>>, vector<128x128xf32>,
    } else {
    }
    %c0 = arith.constant 0 : index
    %c0_1 = arith.constant 0 : index
    %3 = vector.load %arg7[%c0, %c0_1] : memref<128x128xf32, #tpu.memory_space<vmem>>, vector<128x128xf32>
    %c0_2 = arith.constant 0 : index
    %c0_3 = arith.constant 0 : index
    %4 = vector.load %arg3[%c0_2, %c0_3] : memref<128x128xbf16, #tpu.memory_space<vmem>>, vector<128x128xbf16>
    %c0_4 = arith.constant 0 : index
    %c0_5 = arith.constant 0 : index
    %5 = vector.load %arg4[%c0_4, %c0_5] : memref<128x128xbf16, #tpu.memory_space<vmem>>, vector<128x128xbf16>
    %cst = arith.constant dense<0.000000e+00> : vector<128x128xf32>
    %6 = tpu.matmul %4, %5, %cst {dimension_numbers = #tpu.dot_dimension_numbers<[1], [0], [0], [1], [0, 0, 1, 1], [], []>} : vector<128x128xbf16>, vector<128x128xbf16>, vector<128x128xf32> -> vector<128x128xf32>
    %7 = arith.addf %3, %6 : vector<128x128xf32>
    %c0_6 = arith.constant 0 : index
    %c0_7 = arith.constant 0 : index
    %8 = vector.load %arg7[%c0_6, %c0_7] : memref<128x128xf32, #tpu.memory_space<vmem>>, vector<128x128xf32>
    tpu.vector_store %arg7[%c0_6, %c0_7], %7 {strides = array<i32>} : memref<128x128xf32, #tpu.memory_space<vmem>>, vector<128x128xf32>,
    %c0_i32_8 = arith.constant 0 : i32
    %9 = arith.cmpi eq, %arg2, %c0_i32_8 : i32
    %10 = arith.extui %9 : i1 to i32
    %c0_i32_9 = arith.constant 0 : i32
    %11 = arith.cmpi ne, %10, %c0_i32_9 : i32
    scf.if %11 {
      %c0_10 = arith.constant 0 : index
      %c0_11 = arith.constant 0 : index
      %12 = vector.load %arg7[%c0_10, %c0_11] : memref<128x128xf32, #tpu.memory_space<vmem>>, vector<128x128xf32>
      %c0_12 = arith.constant 0 : index
      %c0_13 = arith.constant 0 : index
      %13 = vector.load %arg5[%c0_12, %c0_13] : memref<1x128xf32, #tpu.memory_space<vmem>>, vector<1x128xf32>
      %14 = vector.broadcast %13 : vector<1x128xf32> to vector<128x128xf32>
      %15 = arith.addf %12, %14 : vector<128x128xf32>
      %c0_14 = arith.constant 0 : index
      %c0_15 = arith.constant 0 : index
      %16 = vector.load %arg6[%c0_14, %c0_15] : memref<128x128xf32, #tpu.memory_space<vmem>>, vector<128x128xf32>
      tpu.vector_store %arg6[%c0_14, %c0_15], %15 {strides = array<i32>} : memref<128x128xf32, #tpu.memory_space<vmem>>, vector<128x128xf32>,
    } else {
    }
    return
  }
  func.func @transform_0(%arg0: i32, %arg1: i32, %arg2: i32) -> (i32, i32) {
    %c0_i32 = arith.constant 0 : i32
    return %arg0, %arg2 : i32, i32
  }
  func.func @transform_1(%arg0: i32, %arg1: i32, %arg2: i32) -> (i32, i32) {
    %c0_i32 = arith.constant 0 : i32
    return %arg2, %arg1 : i32, i32
  }
  func.func @transform_2(%arg0: i32, %arg1: i32, %arg2: i32) -> (i32, i32) {
    %c0_i32 = arith.constant 0 : i32
    %c0_i32_0 = arith.constant 0 : i32
    return %c0_i32, %arg1 : i32, i32
  }
  func.func @transform_3(%arg0: i32, %arg1: i32, %arg2: i32) -> (i32, i32) {
    %c0_i32 = arith.constant 0 : i32
    return %arg0, %arg1 : i32, i32
  }
}

</mosaic_0001>

<llo_original>
// kernel: tpu_custom_call.1
$region0: #{tpu_custom_call.1}
  #allocation0 [shape = 'u32[]', space=smem, size = 0x4, offset = 0x4, fixed_abs, tag = 'smem constant byte address 0x4 - core index']
  #allocation1 [shape = 'u32[144,128]{1,0:T(1,128)}', space=vmem, size = 0x12000, scoped, tag = 'internal scratch']
  #allocation2 [shape = 'f32[128,128]{1,0:T(8,128)}', space=vmem, size = 0x10000, scoped, tag = 'scratch operand']
  %s0 = inlined_call_operand.hbm [shape: bf16[512,128], index: 0, kind: input, shape index: {}]
  %s1 = inlined_call_operand.hbm [shape: bf16[128,128], index: 1, kind: input, shape index: {}]
  %s2 = inlined_call_operand.vmem [shape: f32[1,128], index: 2, kind: input, shape index: {}]
  %s3 = inlined_call_operand.hbm [shape: f32[512,128], index: 3, kind: output, shape index: {}]
  %s4 = sld [smem:[#allocation0]]
  $region61: #{tpu_custom_call.1} parent=0
    _
  %s6 = ssub.s32 1, %s4
  %s7 = scalar_select 0, %s6, %s4
  $region1: #{tpu_custom_call.1} parent=0
    #allocation3 [shape = 'u8[65536]{0}', space=vmem, size = 0x10000, scoped, tag = 'input window, operand 0']
    #allocation4 [shape = 's32[2]{0}', space=sflag, size = 0x8, scoped, tag = 'scoped memory for tpu_custom_call.1']
    #allocation5 [shape = 's32[2]{0}', space=sflag, size = 0x8, scoped, tag = 'scoped memory for tpu_custom_call.1']
    #allocation6 [shape = 'u8[32768]{0}', space=vmem, size = 0x8000, scoped, tag = 'input window, operand 1, single buffered']
    #allocation7 [shape = 's32[1]{0}', space=sflag, size = 0x4, scoped, tag = 'scoped memory for tpu_custom_call.1']
    #allocation8 [shape = 'u8[131072]{0}', space=vmem, size = 0x20000, scoped, tag = 'output window, operand 0']
    %8 = vsyncpa [#allocation4], 0
    %s9 = scalar_lea.sflag [#allocation4], 1
    %10 = vsyncpa %s9, 0
    %11 = vsyncpa [#allocation7], 0
    %12 = vsyncpa [#allocation5], 0
    %s13 = scalar_lea.sflag [#allocation5], 1
    %14 = vsyncpa %s13, 0
    loop: start=0, step=1, limit=6
    $region2: #{tpu_custom_call.1} parent=1 // loop_pre_header
      _
    $region3: #{tpu_custom_call.1} parent=1 // loop_header
      %s16 = sphi 0, %s20
      %p17 = scmp.ge.s32.totalorder %s16, 6
      %s23 = sphi 0, %s42
      %s24 = sphi 0, %s38
      %s25 = sphi 0, %s34
      %s26 = sphi 0, %s23
      %s27 = sphi 0, %s24
      %s28 = sphi 0, %s25
      %s29 = sphi 0, %s26
      %s30 = sphi 0, %s27
      %s31 = sphi 0, %s28
      %s47 = sphi 0, %s49
      %s50 = sphi 0, %s47
      %s51 = sphi 0, %s50
      %s67 = sphi 0, %s51
      %s75 = sphi 0, %s77
      %s78 = sphi 0, %s75
      %s79 = sphi 0, %s78
      %s95 = sphi 0, %s79
      %s101 = sphi 0, %s103
      %s104 = sphi 0, %s101
      %s105 = sphi 0, %s104
      %s121 = sphi 0, %s105
      %s129 = sphi 0, %s131
      %s132 = sphi 0, %s129
      %s133 = sphi 0, %s132
      %s149 = sphi 0, %s133
    $region4: #{tpu_custom_call.1} parent=1 // loop_header_branch
      %19 = sbr.rel (%p17) target = $region8
    $region5: #{tpu_custom_call.1} parent=1 // loop_body
      %s21 = ssub.s32 %s16, 1
      %s22 = ssub.s32 %s16, 2
      %s32 = sadd.s32 1, %s25
      %p33 = scmp.ge.s32.totalorder %s32, 1
      %s34 = scalar_select %p33, 0, %s32
      %s35 = sadd.s32 1, %s24
      %s36 = scalar_select %p33, %s35, %s24
      %p37 = scmp.ge.s32.totalorder %s36, 1
      %s38 = scalar_select %p37, 0, %s36
      %s39 = sadd.s32 1, %s23
      %s40 = scalar_select %p37, %s39, %s23
      %p41 = scmp.ge.s32.totalorder %s40, 4
      %s42 = scalar_select %p41, 0, %s40
      %s43 = ssub.s32 %s23, %s42
      %s44 = ssub.s32 %s25, %s34
      %s45 = sor.u32 %s43, %s44
      %p46 = scmp.eq.s32.totalorder %s45, 0
      %s48 = sadd.s32 %s47, 1
      %s49 = scalar_select %p46, %s47, %s48
      %p52 = pneg %p46
      %p53 = scmp.eq.s32.totalorder %s16, 3
      %p54 = por %p52, %p53
      %p55 = scmp.ne.s32.totalorder %s47, %s50
      %p56 = scmp.eq.s32.totalorder %s16, 0
      %p57 = por %p55, %p56
      %p58 = scmp.ne.s32.totalorder %s47, %s50
      %p59 = scmp.eq.s32.totalorder %s21, 3
      %p60 = por %p58, %p59
      %p61 = scmp.ne.s32.totalorder %s50, %s51
      %p62 = scmp.eq.s32.totalorder %s21, 0
      %p63 = por %p61, %p62
      %p64 = scmp.ne.s32.totalorder %s50, %s51
      %p65 = scmp.eq.s32.totalorder %s22, 3
      %p66 = por %p64, %p65
      %p68 = scmp.ne.s32.totalorder %s51, %s67
      %p69 = scmp.eq.s32.totalorder %s22, 0
      %p70 = por %p68, %p69
      %s71 = ssub.s32 %s25, %s34
      %s72 = ssub.s32 %s24, %s38
      %s73 = sor.u32 %s71, %s72
      %p74 = scmp.eq.s32.totalorder %s73, 0
      %s76 = sadd.s32 %s75, 1
      %s77 = scalar_select %p74, %s75, %s76
      %p80 = pneg %p74
      %p81 = scmp.eq.s32.totalorder %s16, 3
      %p82 = por %p80, %p81
      %p83 = scmp.ne.s32.totalorder %s75, %s78
      %p84 = scmp.eq.s32.totalorder %s16, 0
      %p85 = por %p83, %p84
      %p86 = scmp.ne.s32.totalorder %s75, %s78
      %p87 = scmp.eq.s32.totalorder %s21, 3
      %p88 = por %p86, %p87
      %p89 = scmp.ne.s32.totalorder %s78, %s79
      %p90 = scmp.eq.s32.totalorder %s21, 0
      %p91 = por %p89, %p90
      %p92 = scmp.ne.s32.totalorder %s78, %s79
      %p93 = scmp.eq.s32.totalorder %s22, 3
      %p94 = por %p92, %p93
      %p96 = scmp.ne.s32.totalorder %s79, %s95
      %p97 = scmp.eq.s32.totalorder %s22, 0
      %p98 = por %p96, %p97
      %s99 = ssub.s32 %s24, %s38
      %p100 = scmp.eq.s32.totalorder %s99, 0
      %s102 = sadd.s32 %s101, 1
      %s103 = scalar_select %p100, %s101, %s102
      %p106 = pneg %p100
      %p107 = scmp.eq.s32.totalorder %s16, 3
      %p108 = por %p106, %p107
      %p109 = scmp.ne.s32.totalorder %s101, %s104
      %p110 = scmp.eq.s32.totalorder %s16, 0
      %p111 = por %p109, %p110
      %p112 = scmp.ne.s32.totalorder %s101, %s104
      %p113 = scmp.eq.s32.totalorder %s21, 3
      %p114 = por %p112, %p113
      %p115 = scmp.ne.s32.totalorder %s104, %s105
      %p116 = scmp.eq.s32.totalorder %s21, 0
      %p117 = por %p115, %p116
      %p118 = scmp.ne.s32.totalorder %s104, %s105
      %p119 = scmp.eq.s32.totalorder %s22, 3
      %p120 = por %p118, %p119
      %p122 = scmp.ne.s32.totalorder %s105, %s121
      %p123 = scmp.eq.s32.totalorder %s22, 0
      %p124 = por %p122, %p123
      %s125 = ssub.s32 %s23, %s42
      %s126 = ssub.s32 %s24, %s38
      %s127 = sor.u32 %s125, %s126
      %p128 = scmp.eq.s32.totalorder %s127, 0
      %s130 = sadd.s32 %s129, 1
      %s131 = scalar_select %p128, %s129, %s130
      %p134 = pneg %p128
      %p135 = scmp.eq.s32.totalorder %s16, 3
      %p136 = por %p134, %p135
      %p137 = scmp.ne.s32.totalorder %s129, %s132
      %p138 = scmp.eq.s32.totalorder %s16, 0
      %p139 = por %p137, %p138
      %p140 = scmp.ne.s32.totalorder %s129, %s132
      %p141 = scmp.eq.s32.totalorder %s21, 3
      %p142 = por %p140, %p141
      %p143 = scmp.ne.s32.totalorder %s132, %s133
      %p144 = scmp.eq.s32.totalorder %s21, 0
      %p145 = por %p143, %p144
      %p146 = scmp.ne.s32.totalorder %s132, %s133
      %p147 = scmp.eq.s32.totalorder %s22, 3
      %p148 = por %p146, %p147
      %p150 = scmp.ne.s32.totalorder %s133, %s149
      %p151 = scmp.eq.s32.totalorder %s22, 0
      %p152 = por %p150, %p151
      %p153 = scmp.le.s32.totalorder 1, %s16
      %p154 = scmp.lt.s32.totalorder %s16, 5
      %p155 = pnand %p153, %p154
      %p156 = pneg %p155
      // Predicated region
      $region9: #{tpu_custom_call.1} parent=5 // pred_check
        _
      $region10: #{tpu_custom_call.1} parent=5 // pred_check_branch
        %158 = sbr.rel (%p155) target = $region12
      $region11: #{tpu_custom_call.1} parent=5 // pred_region
        %s159 = ssub.s32 %s16, 1
        // Predicated region
        $region13: #{tpu_custom_call.1} parent=11 // pred_check
          %p160 = pneg %p91
        $region14: #{tpu_custom_call.1} parent=11 // pred_check_branch
          %162 = sbr.rel (%p160) target = $region16
        $region15: #{tpu_custom_call.1} parent=11 // pred_region
          %s163 = smul.u32 16, %s28
          %s165 = ssub.s32 1024, 1024
          %166 = vsyncadd [#allocation7], %s165
          %s167 = sadd.s32 %s27, %s163
          %s168 = smul.addr %s167, 64
          %s169 = scalar_lea.hbm %s1, %s168
          %s170 = sshll.u32 [#allocation6], 4
          %s171 = int_to_ptr.vmem [resolvable:$true] %s170
          %176 = dma.hbm_to_vmem [thread:$0]  %s169, 1024, %s171, [#allocation7], 64, 64, 4
        $region16: #{tpu_custom_call.1} parent=11 // pred_fallthru
          _
        // Predicated region
        $region17: #{tpu_custom_call.1} parent=11 // pred_check
          %p177 = pneg %p117
        $region18: #{tpu_custom_call.1} parent=11 // pred_check_branch
          %179 = sbr.rel (%p177) target = $region20
        $region19: #{tpu_custom_call.1} parent=11 // pred_region
          %p180 = scmp.lt.s32.totalorder %s27, 0
          %s181 = scalar_select %p180, %s27, 0
          %s182 = scalar_lea.vmem %s2, %s181
        $region20: #{tpu_custom_call.1} parent=11 // pred_fallthru
          _
      $region12: #{tpu_custom_call.1} parent=5 // pred_fallthru
        _
      %p183 = scmp.lt.s32.totalorder %s16, 4
      // Predicated region
      $region21: #{tpu_custom_call.1} parent=5 // pred_check
        %p184 = pneg %p183
      $region22: #{tpu_custom_call.1} parent=5 // pred_check_branch
        %186 = sbr.rel (%p184) target = $region24
      $region23: #{tpu_custom_call.1} parent=5 // pred_region
        // Predicated region
        $region25: #{tpu_custom_call.1} parent=23 // pred_check
          %p187 = pneg %p57
        $region26: #{tpu_custom_call.1} parent=23 // pred_check_branch
          %189 = sbr.rel (%p187) target = $region28
        $region27: #{tpu_custom_call.1} parent=23 // pred_region
          %s190 = sand.u32 %s47, 1
          %s191 = scalar_lea.sflag [#allocation4], %s190
          %s192 = sand.u32 %s47, 1
          %s193 = smul.addr %s192, 64
          %s194 = scalar_lea.vmem [#allocation3], %s193
          %s195 = smul.u32 16, %s23
          %s197 = ssub.s32 1024, 1024
          %198 = vsyncadd %s191, %s197
          %s199 = sadd.s32 %s25, %s195
          %s200 = smul.addr %s199, 64
          %s201 = scalar_lea.hbm %s0, %s200
          %s202 = sshll.u32 %s194, 4
          %s203 = int_to_ptr.vmem [resolvable:$true] %s202
          %208 = dma.hbm_to_vmem [thread:$0]  %s201, 1024, %s203, %s191, 64, 64, 4
        $region28: #{tpu_custom_call.1} parent=23 // pred_fallthru
          _
      $region24: #{tpu_custom_call.1} parent=5 // pred_fallthru
        _
      %p209 = scmp.le.s32.totalorder 1, %s16
      %p210 = scmp.lt.s32.totalorder %s16, 5
      %p211 = pnand %p209, %p210
      %p212 = pneg %p211
      // Predicated region
      $region29: #{tpu_custom_call.1} parent=5 // pred_check
        _
      $region30: #{tpu_custom_call.1} parent=5 // pred_check_branch
        %214 = sbr.rel (%p211) target = $region32
      $region31: #{tpu_custom_call.1} parent=5 // pred_region
        %s215 = ssub.s32 %s16, 1
        %s216 = sand.u32 %s50, 1
        %s217 = scalar_lea.sflag [#allocation4], %s216
        %s218 = sand.u32 %s50, 1
        %s219 = smul.addr %s218, 64
        %s220 = scalar_lea.vmem [#allocation3], %s219
        // Predicated region
        $region33: #{tpu_custom_call.1} parent=31 // pred_check
          %p221 = pneg %p63
        $region34: #{tpu_custom_call.1} parent=31 // pred_check_branch
          %223 = sbr.rel (%p221) target = $region36
        $region35: #{tpu_custom_call.1} parent=31 // pred_region
          %224 = dma.done %s217, 1024
        $region36: #{tpu_custom_call.1} parent=31 // pred_fallthru
          _
        // Predicated region
        $region37: #{tpu_custom_call.1} parent=31 // pred_check
          %p225 = pneg %p91
        $region38: #{tpu_custom_call.1} parent=31 // pred_check_branch
          %227 = sbr.rel (%p225) target = $region40
        $region39: #{tpu_custom_call.1} parent=31 // pred_region
          %228 = dma.done [#allocation7], 1024
        $region40: #{tpu_custom_call.1} parent=31 // pred_fallthru
          _
        %s229 = sand.u32 %s50, 1
        %s230 = scalar_lea.sflag [#allocation4], %s229
        %s231 = sand.u32 %s50, 1
        %s232 = smul.addr %s231, 64
        %s233 = scalar_lea.vmem [#allocation3], %s232
        %p234 = pneg %p63
        %p235 = pneg %p60
        %p236 = pneg %p91
        %p237 = pneg %p88
        %p238 = scmp.lt.s32.totalorder %s27, 0
        %s239 = scalar_select %p238, %s27, 0
        %s240 = scalar_lea.vmem %s2, %s239
        %p241 = pneg %p117
        %p242 = pneg %p114
        %p243 = pneg %p145
        %p244 = pneg %p142
        %s245 = sand.u32 %s132, 1
        %s246 = scalar_lea.sflag [#allocation5], %s245
        %s247 = sand.u32 %s132, 1
        %s248 = smul.addr %s247, 128
        %s249 = scalar_lea.vmem [#allocation8], %s248
        %s250 = smul.u32 16, %s26
        %s251 = smul.u32 16, %s28
        %p252 = scmp.lt.s32.totalorder %s27, 0
        %s253 = scalar_select %p252, %s27, 0
        %s254 = scalar_lea.vmem %s2, %s253
        %s255 = smul.u32 16, %s26
        %p257 = scmp.eq.s32.totalorder %s28, 0
        // Predicated region
        $region41: #{tpu_custom_call.1} parent=31 // pred_check
          %p258 = pneg %p257
        $region42: #{tpu_custom_call.1} parent=31 // pred_check_branch
          %260 = sbr.rel (%p258) target = $region44
        $region43: #{tpu_custom_call.1} parent=31 // pred_region
          %261 = vst [vmem:[#allocation2] sm:$0xff] 0.0
          %262 = vst [vmem:[#allocation2 + $0x8] sm:$0xff] 0.0
          %263 = vst [vmem:[#allocation2 + $0x10] sm:$0xff] 0.0
          %264 = vst [vmem:[#allocation2 + $0x18] sm:$0xff] 0.0
          %265 = vst [vmem:[#allocation2 + $0x20] sm:$0xff] 0.0
          %266 = vst [vmem:[#allocation2 + $0x28] sm:$0xff] 0.0
          %267 = vst [vmem:[#allocation2 + $0x30] sm:$0xff] 0.0
          %268 = vst [vmem:[#allocation2 + $0x38] sm:$0xff] 0.0
          %269 = vst [vmem:[#allocation2 + $0x40] sm:$0xff] 0.0
          %270 = vst [vmem:[#allocation2 + $0x48] sm:$0xff] 0.0
          %271 = vst [vmem:[#allocation2 + $0x50] sm:$0xff] 0.0
          %272 = vst [vmem:[#allocation2 + $0x58] sm:$0xff] 0.0
          %273 = vst [vmem:[#allocation2 + $0x60] sm:$0xff] 0.0
          %274 = vst [vmem:[#allocation2 + $0x68] sm:$0xff] 0.0
          %275 = vst [vmem:[#allocation2 + $0x70] sm:$0xff] 0.0
          %276 = vst [vmem:[#allocation2 + $0x78] sm:$0xff] 0.0
        $region44: #{tpu_custom_call.1} parent=31 // pred_fallthru
          _
        %v277 = vld [vmem:[#allocation2] sm:$0xff]
        %v278 = vld [vmem:[#allocation2 + $0x8] sm:$0xff]
        %v279 = vld [vmem:[#allocation2 + $0x10] sm:$0xff]
        %v280 = vld [vmem:[#allocation2 + $0x18] sm:$0xff]
        %v281 = vld [vmem:[#allocation2 + $0x20] sm:$0xff]
        %v282 = vld [vmem:[#allocation2 + $0x28] sm:$0xff]
        %v283 = vld [vmem:[#allocation2 + $0x30] sm:$0xff]
        %v284 = vld [vmem:[#allocation2 + $0x38] sm:$0xff]
        %v285 = vld [vmem:[#allocation2 + $0x40] sm:$0xff]
        %v286 = vld [vmem:[#allocation2 + $0x48] sm:$0xff]
        %v287 = vld [vmem:[#allocation2 + $0x50] sm:$0xff]
        %v288 = vld [vmem:[#allocation2 + $0x58] sm:$0xff]
        %v289 = vld [vmem:[#allocation2 + $0x60] sm:$0xff]
        %v290 = vld [vmem:[#allocation2 + $0x68] sm:$0xff]
        %v291 = vld [vmem:[#allocation2 + $0x70] sm:$0xff]
        %v292 = vld [vmem:[#allocation2 + $0x78] sm:$0xff]
        %v293 = vld [vmem:[%s220] sm:$0xf]
        %v294 = vld [vmem:[%s220 + $0x4] sm:$0xf]
        %v295 = vld [vmem:[%s220 + $0x8] sm:$0xf]
        %v296 = vld [vmem:[%s220 + $0xc] sm:$0xf]
        %v297 = vld [vmem:[%s220 + $0x10] sm:$0xf]
        %v298 = vld [vmem:[%s220 + $0x14] sm:$0xf]
        %v299 = vld [vmem:[%s220 + $0x18] sm:$0xf]
        %v300 = vld [vmem:[%s220 + $0x1c] sm:$0xf]
        %v301 = vld [vmem:[%s220 + $0x20] sm:$0xf]
        %v302 = vld [vmem:[%s220 + $0x24] sm:$0xf]
        %v303 = vld [vmem:[%s220 + $0x28] sm:$0xf]
        %v304 = vld [vmem:[%s220 + $0x2c] sm:$0xf]
        %v305 = vld [vmem:[%s220 + $0x30] sm:$0xf]
        %v306 = vld [vmem:[%s220 + $0x34] sm:$0xf]
        %v307 = vld [vmem:[%s220 + $0x38] sm:$0xf]
        %v308 = vld [vmem:[%s220 + $0x3c] sm:$0xf]
        %v309 = vld [vmem:[#allocation6] sm:$0xf]
        %v310 = vld [vmem:[#allocation6 + $0x4] sm:$0xf]
        %v311 = vld [vmem:[#allocation6 + $0x8] sm:$0xf]
        %v312 = vld [vmem:[#allocation6 + $0xc] sm:$0xf]
        %v313 = vld [vmem:[#allocation6 + $0x10] sm:$0xf]
        %v314 = vld [vmem:[#allocation6 + $0x14] sm:$0xf]
        %v315 = vld [vmem:[#allocation6 + $0x18] sm:$0xf]
        %v316 = vld [vmem:[#allocation6 + $0x1c] sm:$0xf]
        %v317 = vld [vmem:[#allocation6 + $0x20] sm:$0xf]
        %v318 = vld [vmem:[#allocation6 + $0x24] sm:$0xf]
        %v319 = vld [vmem:[#allocation6 + $0x28] sm:$0xf]
        %v320 = vld [vmem:[#allocation6 + $0x2c] sm:$0xf]
        %v321 = vld [vmem:[#allocation6 + $0x30] sm:$0xf]
        %v322 = vld [vmem:[#allocation6 + $0x34] sm:$0xf]
        %v323 = vld [vmem:[#allocation6 + $0x38] sm:$0xf]
        %v324 = vld [vmem:[#allocation6 + $0x3c] sm:$0xf]
        %v341 = vunpack.c.l.b16 %v293
        %v342 = vunpack.c.l.b16 %v294
        %v343 = vunpack.c.l.b16 %v295
        %v344 = vunpack.c.l.b16 %v296
        %v345 = vunpack.c.l.b16 %v297
        %v346 = vunpack.c.l.b16 %v298
        %v347 = vunpack.c.l.b16 %v299
        %v348 = vunpack.c.l.b16 %v300
        %v349 = vunpack.c.l.b16 %v301
        %v350 = vunpack.c.l.b16 %v302
        %v351 = vunpack.c.l.b16 %v303
        %v352 = vunpack.c.l.b16 %v304
        %v353 = vunpack.c.l.b16 %v305
        %v354 = vunpack.c.l.b16 %v306
        %v355 = vunpack.c.l.b16 %v307
        %v356 = vunpack.c.l.b16 %v308
        %v357 = vpack.c.b16 %v342, %v341
        %v358 = vpack.c.b16 %v344, %v343
        %v359 = vpack.c.b16 %v346, %v345
        %v360 = vpack.c.b16 %v348, %v347
        %v361 = vpack.c.b16 %v350, %v349
        %v362 = vpack.c.b16 %v352, %v351
        %v363 = vpack.c.b16 %v354, %v353
        %v364 = vpack.c.b16 %v356, %v355
        %v389 = vunpack.c.l.b16 %v309
        %v390 = vunpack.c.l.b16 %v310
        %v391 = vunpack.c.l.b16 %v311
        %v392 = vunpack.c.l.b16 %v312
        %v393 = vunpack.c.l.b16 %v313
        %v394 = vunpack.c.l.b16 %v314
        %v395 = vunpack.c.l.b16 %v315
        %v396 = vunpack.c.l.b16 %v316
        %v397 = vunpack.c.l.b16 %v317
        %v398 = vunpack.c.l.b16 %v318
        %v399 = vunpack.c.l.b16 %v319
        %v400 = vunpack.c.l.b16 %v320
        %v401 = vunpack.c.l.b16 %v321
        %v402 = vunpack.c.l.b16 %v322
        %v403 = vunpack.c.l.b16 %v323
        %v404 = vunpack.c.l.b16 %v324
        %v405 = vpack.c.b16 %v390, %v389
        %v406 = vpack.c.b16 %v392, %v391
        %v407 = vpack.c.b16 %v394, %v393
        %v408 = vpack.c.b16 %v396, %v395
        %v409 = vpack.c.b16 %v398, %v397
        %v410 = vpack.c.b16 %v400, %v399
        %v411 = vpack.c.b16 %v402, %v401
        %v412 = vpack.c.b16 %v404, %v403
        %421 = vmatprep.subr.bf16.mxu0 0
        %422 = vmatpush1.bf16.msra.mxu0 %v405
        %423 = vmatprep.subr.bf16.mxu0 0
        %424 = vmatpush1.bf16.msra.mxu0 %v406
        %425 = vmatprep.subr.bf16.mxu0 0
        %426 = vmatpush1.bf16.msra.mxu0 %v407
        %427 = vmatprep.subr.bf16.mxu0 0
        %428 = vmatpush1.bf16.msra.mxu0 %v408
        %429 = vmatprep.subr.bf16.mxu0 0
        %430 = vmatpush1.bf16.msra.mxu0 %v409
        %431 = vmatprep.subr.bf16.mxu0 0
        %432 = vmatpush1.bf16.msra.mxu0 %v410
        %433 = vmatprep.subr.bf16.mxu0 0
        %434 = vmatpush1.bf16.msra.mxu0 %v411
        %435 = vmatprep.subr.bf16.mxu0 0
        %436 = vmatpush1.bf16.msra.mxu0 %v412
        %437 = vmatprep.subr.bf16.mxu0 0
        %438 = vmatpush1.bf16.msra.mxu0 0
        %439 = vmatprep.subr.bf16.mxu0 0
        %440 = vmatpush1.bf16.msra.mxu0 0
        %441 = vmatprep.subr.bf16.mxu0 0
        %442 = vmatpush1.bf16.msra.mxu0 0
        %443 = vmatprep.subr.bf16.mxu0 0
        %444 = vmatpush1.bf16.msra.mxu0 0
        %445 = vmatprep.subr.bf16.mxu0 0
        %446 = vmatpush1.bf16.msra.mxu0 0
        %447 = vmatprep.subr.bf16.mxu0 0
        %448 = vmatpush1.bf16.msra.mxu0 0
        %449 = vmatprep.subr.bf16.mxu0 0
        %450 = vmatpush1.bf16.msra.mxu0 0
        %451 = vmatprep.subr.bf16.mxu0 0
        %452 = vmatpush1.bf16.msra.mxu0 0
        %453 = vmatprep.mubr.bf16.mxu0 0
        %454 = vmatmul.mubr.bf16.gmra.mrb[0].mxu0 %v357
        %v455 = vpop.f32.mrb[0].mxu0
        %v456 = vadd.f32 0.0, %v455
        %v457 = vpop.f32.mrb[0].mxu0
        %v458 = vpop.f32.mrb[0].mxu0
        %v459 = vadd.f32 0.0, %v458
        %v460 = vpop.f32.mrb[0].mxu0
        %461 = vmatprep.mubr.bf16.mxu0 0
        %462 = vmatmul.mubr.bf16.gmra.mrb[0].mxu0 %v358
        %v463 = vpop.f32.mrb[0].mxu0
        %v464 = vadd.f32 0.0, %v463
        %v465 = vpop.f32.mrb[0].mxu0
        %v466 = vpop.f32.mrb[0].mxu0
        %v467 = vadd.f32 0.0, %v466
        %v468 = vpop.f32.mrb[0].mxu0
        %469 = vmatprep.mubr.bf16.mxu0 0
        %470 = vmatmul.mubr.bf16.gmra.mrb[0].mxu0 %v359
        %v471 = vpop.f32.mrb[0].mxu0
        %v472 = vadd.f32 0.0, %v471
        %v473 = vpop.f32.mrb[0].mxu0
        %v474 = vpop.f32.mrb[0].mxu0
        %v475 = vadd.f32 0.0, %v474
        %v476 = vpop.f32.mrb[0].mxu0
        %477 = vmatprep.mubr.bf16.mxu0 0
        %478 = vmatmul.mubr.bf16.gmra.mrb[0].mxu0 %v360
        %v479 = vpop.f32.mrb[0].mxu0
        %v480 = vadd.f32 0.0, %v479
        %v481 = vpop.f32.mrb[0].mxu0
        %v482 = vpop.f32.mrb[0].mxu0
        %v483 = vadd.f32 0.0, %v482
        %v484 = vpop.f32.mrb[0].mxu0
        %485 = vmatprep.mubr.bf16.mxu0 0
        %486 = vmatmul.mubr.bf16.gmra.mrb[0].mxu0 %v361
        %v487 = vpop.f32.mrb[0].mxu0
        %v488 = vadd.f32 0.0, %v487
        %v489 = vpop.f32.mrb[0].mxu0
        %v490 = vpop.f32.mrb[0].mxu0
        %v491 = vadd.f32 0.0, %v490
        %v492 = vpop.f32.mrb[0].mxu0
        %493 = vmatprep.mubr.bf16.mxu0 0
        %494 = vmatmul.mubr.bf16.gmra.mrb[0].mxu0 %v362
        %v495 = vpop.f32.mrb[0].mxu0
        %v496 = vadd.f32 0.0, %v495
        %v497 = vpop.f32.mrb[0].mxu0
        %v498 = vpop.f32.mrb[0].mxu0
        %v499 = vadd.f32 0.0, %v498
        %v500 = vpop.f32.mrb[0].mxu0
        %501 = vmatprep.mubr.bf16.mxu0 0
        %502 = vmatmul.mubr.bf16.gmra.mrb[0].mxu0 %v363
        %v503 = vpop.f32.mrb[0].mxu0
        %v504 = vadd.f32 0.0, %v503
        %v505 = vpop.f32.mrb[0].mxu0
        %v506 = vpop.f32.mrb[0].mxu0
        %v507 = vadd.f32 0.0, %v506
        %v508 = vpop.f32.mrb[0].mxu0
        %509 = vmatprep.mubr.bf16.mxu0 0
        %510 = vmatmul.mubr.bf16.gmra.mrb[0].mxu0 %v364
        %v511 = vpop.f32.mrb[0].mxu0
        %v512 = vadd.f32 0.0, %v511
        %v513 = vpop.f32.mrb[0].mxu0
        %v514 = vpop.f32.mrb[0].mxu0
        %v515 = vadd.f32 0.0, %v514
        %v516 = vpop.f32.mrb[0].mxu0
        %517 = vdwg.mxu0
        %v518 = vadd.f32 %v277, %v456
        %v519 = vadd.f32 %v278, %v459
        %v520 = vadd.f32 %v279, %v464
        %v521 = vadd.f32 %v280, %v467
        %v522 = vadd.f32 %v281, %v472
        %v523 = vadd.f32 %v282, %v475
        %v524 = vadd.f32 %v283, %v480
        %v525 = vadd.f32 %v284, %v483
        %v526 = vadd.f32 %v285, %v488
        %v527 = vadd.f32 %v286, %v491
        %v528 = vadd.f32 %v287, %v496
        %v529 = vadd.f32 %v288, %v499
        %v530 = vadd.f32 %v289, %v504
        %v531 = vadd.f32 %v290, %v507
        %v532 = vadd.f32 %v291, %v512
        %v533 = vadd.f32 %v292, %v515
        %534 = vst [vmem:[#allocation2] sm:$0xff] %v518
        %535 = vst [vmem:[#allocation2 + $0x8] sm:$0xff] %v519
        %536 = vst [vmem:[#allocation2 + $0x10] sm:$0xff] %v520
        %537 = vst [vmem:[#allocation2 + $0x18] sm:$0xff] %v521
        %538 = vst [vmem:[#allocation2 + $0x20] sm:$0xff] %v522
        %539 = vst [vmem:[#allocation2 + $0x28] sm:$0xff] %v523
        %540 = vst [vmem:[#allocation2 + $0x30] sm:$0xff] %v524
        %541 = vst [vmem:[#allocation2 + $0x38] sm:$0xff] %v525
        %542 = vst [vmem:[#allocation2 + $0x40] sm:$0xff] %v526
        %543 = vst [vmem:[#allocation2 + $0x48] sm:$0xff] %v527
        %544 = vst [vmem:[#allocation2 + $0x50] sm:$0xff] %v528
        %545 = vst [vmem:[#allocation2 + $0x58] sm:$0xff] %v529
        %546 = vst [vmem:[#allocation2 + $0x60] sm:$0xff] %v530
        %547 = vst [vmem:[#allocation2 + $0x68] sm:$0xff] %v531
        %548 = vst [vmem:[#allocation2 + $0x70] sm:$0xff] %v532
        %549 = vst [vmem:[#allocation2 + $0x78] sm:$0xff] %v533
        // Predicated region
        $region45: #{tpu_custom_call.1} parent=31 // pred_check
          %p550 = pneg %p257
        $region46: #{tpu_custom_call.1} parent=31 // pred_check_branch
          %552 = sbr.rel (%p550) target = $region48
        $region47: #{tpu_custom_call.1} parent=31 // pred_region
          %v553 = vld [vmem:[#allocation2] sm:$0xff]
          %v554 = vld [vmem:[#allocation2 + $0x8] sm:$0xff]
          %v555 = vld [vmem:[#allocation2 + $0x10] sm:$0xff]
          %v556 = vld [vmem:[#allocation2 + $0x18] sm:$0xff]
          %v557 = vld [vmem:[#allocation2 + $0x20] sm:$0xff]
          %v558 = vld [vmem:[#allocation2 + $0x28] sm:$0xff]
          %v559 = vld [vmem:[#allocation2 + $0x30] sm:$0xff]
          %v560 = vld [vmem:[#allocation2 + $0x38] sm:$0xff]
          %v561 = vld [vmem:[#allocation2 + $0x40] sm:$0xff]
          %v562 = vld [vmem:[#allocation2 + $0x48] sm:$0xff]
          %v563 = vld [vmem:[#allocation2 + $0x50] sm:$0xff]
          %v564 = vld [vmem:[#allocation2 + $0x58] sm:$0xff]
          %v565 = vld [vmem:[#allocation2 + $0x60] sm:$0xff]
          %v566 = vld [vmem:[#allocation2 + $0x68] sm:$0xff]
          %v567 = vld [vmem:[#allocation2 + $0x70] sm:$0xff]
          %v568 = vld [vmem:[#allocation2 + $0x78] sm:$0xff]
          %v569 = vld [vmem:[%s254] sm:$0x1]
          %v571 = vlaneseq
          %v572 = vshrl.u32 %v571, 7
          %v573 = vsub.s32 0, %v572
          %v574 = vrot.slane %v569, %v573
          %v576 = vadd.f32 %v553, %v574
          %v577 = vadd.f32 %v554, %v574
          %v578 = vadd.f32 %v555, %v574
          %v579 = vadd.f32 %v556, %v574
          %v580 = vadd.f32 %v557, %v574
          %v581 = vadd.f32 %v558, %v574
          %v582 = vadd.f32 %v559, %v574
          %v583 = vadd.f32 %v560, %v574
          %v584 = vadd.f32 %v561, %v574
          %v585 = vadd.f32 %v562, %v574
          %v586 = vadd.f32 %v563, %v574
          %v587 = vadd.f32 %v564, %v574
          %v588 = vadd.f32 %v565, %v574
          %v589 = vadd.f32 %v566, %v574
          %v590 = vadd.f32 %v567, %v574
          %v591 = vadd.f32 %v568, %v574
          %592 = vst [vmem:[%s249] sm:$0xff] %v576
          %593 = vst [vmem:[%s249 + $0x8] sm:$0xff] %v577
          %594 = vst [vmem:[%s249 + $0x10] sm:$0xff] %v578
          %595 = vst [vmem:[%s249 + $0x18] sm:$0xff] %v579
          %596 = vst [vmem:[%s249 + $0x20] sm:$0xff] %v580
          %597 = vst [vmem:[%s249 + $0x28] sm:$0xff] %v581
          %598 = vst [vmem:[%s249 + $0x30] sm:$0xff] %v582
          %599 = vst [vmem:[%s249 + $0x38] sm:$0xff] %v583
          %600 = vst [vmem:[%s249 + $0x40] sm:$0xff] %v584
          %601 = vst [vmem:[%s249 + $0x48] sm:$0xff] %v585
          %602 = vst [vmem:[%s249 + $0x50] sm:$0xff] %v586
          %603 = vst [vmem:[%s249 + $0x58] sm:$0xff] %v587
          %604 = vst [vmem:[%s249 + $0x60] sm:$0xff] %v588
          %605 = vst [vmem:[%s249 + $0x68] sm:$0xff] %v589
          %606 = vst [vmem:[%s249 + $0x70] sm:$0xff] %v590
          %607 = vst [vmem:[%s249 + $0x78] sm:$0xff] %v591
        $region48: #{tpu_custom_call.1} parent=31 // pred_fallthru
          _
        %s608 = sand.u32 %s132, 1
        %s609 = scalar_lea.sflag [#allocation5], %s608
        %s610 = sand.u32 %s132, 1
        %s611 = smul.addr %s610, 128
        %s612 = scalar_lea.vmem [#allocation8], %s611
        // Predicated region
        $region49: #{tpu_custom_call.1} parent=31 // pred_check
          %p613 = pneg %p142
        $region50: #{tpu_custom_call.1} parent=31 // pred_check_branch
          %615 = sbr.rel (%p613) target = $region52
        $region51: #{tpu_custom_call.1} parent=31 // pred_region
          %s616 = smul.u32 16, %s26
          %s618 = ssub.s32 2048, 2048
          %619 = vsyncadd %s609, %s618
          %s620 = sadd.s32 %s27, %s616
          %s621 = smul.addr %s620, 128
          %s622 = scalar_lea.hbm %s3, %s621
          %s623 = sshll.u32 %s612, 4
          %s624 = int_to_ptr.vmem [resolvable:$true] %s623
          %629 = dma.vmem_to_hbm [thread:$0]  %s624, 2048, %s622, %s609, 128, 128, 8
        $region52: #{tpu_custom_call.1} parent=31 // pred_fallthru
          _
      $region32: #{tpu_custom_call.1} parent=5 // pred_fallthru
        _
      %p630 = scmp.le.s32.totalorder 2, %s16
      // Predicated region
      $region53: #{tpu_custom_call.1} parent=5 // pred_check
        %p631 = pneg %p630
      $region54: #{tpu_custom_call.1} parent=5 // pred_check_branch
        %633 = sbr.rel (%p631) target = $region56
      $region55: #{tpu_custom_call.1} parent=5 // pred_region
        %s634 = ssub.s32 %s16, 2
        // Predicated region
        $region57: #{tpu_custom_call.1} parent=55 // pred_check
          %p635 = pneg %p148
        $region58: #{tpu_custom_call.1} parent=55 // pred_check_branch
          %637 = sbr.rel (%p635) target = $region60
        $region59: #{tpu_custom_call.1} parent=55 // pred_region
          %s638 = sand.u32 %s133, 1
          %s639 = scalar_lea.sflag [#allocation5], %s638
          %s640 = sand.u32 %s133, 1
          %s641 = smul.addr %s640, 128
          %s642 = scalar_lea.vmem [#allocation8], %s641
          %643 = dma.done %s639, 2048
        $region60: #{tpu_custom_call.1} parent=55 // pred_fallthru
          _
      $region56: #{tpu_custom_call.1} parent=5 // pred_fallthru
        _
    $region6: #{tpu_custom_call.1} parent=1 // loop_footer
      %s20 = sadd.s32 1, %s16
    $region7: #{tpu_custom_call.1} parent=1 // loop_footer_branch
      %15 = sbr.rel target = $region3
    $region8: #{tpu_custom_call.1} parent=1 // loop_exit
      _
    %644 = vsyncpa [#allocation4], 1
    %s645 = scalar_lea.sflag [#allocation4], 1
    %646 = vsyncpa %s645, 1
    %647 = vsyncpa [#allocation7], 1
    %648 = vsyncpa [#allocation5], 1
    %s649 = scalar_lea.sflag [#allocation5], 1
    %650 = vsyncpa %s649, 1

</llo_original>
